<compile_context>
chip_gen: v5e
topology: v5e:2x2
jax: 0.10.0
libtpu: 0.0.40
codegen_flags: <defaults>
</compile_context>

<pallas_src>
import functools

import jax
import jax.numpy as jnp
from jax.experimental import pallas as pl
from jax.experimental.pallas import tpu as pltpu

# ~4 MiB x-block per grid step: large enough that the fixed ~0.35 us grid-step
# overhead is <10% of HBM time even at v7x's ~3.2 TB/s, small enough that the
# double-buffered x + out + pe footprint stays well under v7x's 64 MiB VMEM.
_TARGET_BLOCK_BYTES = 4 << 20


def _mix32(v):
    """Murmur3-style 32-bit finalizer (good avalanche; pure uint32 ops)."""
    v = v ^ (v >> 16)
    v = v * jnp.uint32(0x7FEB352D)
    v = v ^ (v >> 15)
    v = v * jnp.uint32(0x846CA68B)
    v = v ^ (v >> 16)
    return v


def _pe_dropout_kernel(seed_ref, x_ref, pe_ref, o_ref, *, p, bt, ts, S, D):
    """One grid step: out block = dropout(x block + pe tile)."""
    x = x_ref[...]            # (bt, ts, D)
    pe = pe_ref[...]          # (ts, D), already in x.dtype (pre-cast in wrapper)
    y = x + pe                # broadcast over the leading batch axis only

    if p > 0.0:
        s_blk = pl.program_id(0)
        b_blk = pl.program_id(1)
        # Scalar (SALU) part: global flat offset of this block's first element.
        b0 = b_blk.astype(jnp.uint32) * jnp.uint32(bt)
        s0 = s_blk.astype(jnp.uint32) * jnp.uint32(ts)
        base = (b0 * jnp.uint32(S) + s0) * jnp.uint32(D)

        shape = y.shape
        b_iota = jax.lax.broadcasted_iota(jnp.uint32, shape, 0)
        s_iota = jax.lax.broadcasted_iota(jnp.uint32, shape, 1)
        d_iota = jax.lax.broadcasted_iota(jnp.uint32, shape, 2)
        # Global element index -> mask is independent of the tiling choice.
        # NOTE: uint32 index; wraps (mask repeats) only if B*S*D >= 2^32.
        idx = (base
               + b_iota * jnp.uint32((S * D) & 0xFFFFFFFF)
               + s_iota * jnp.uint32(D)
               + d_iota)

        # Seed mixing is a per-step scalar computation (scalar ALU, ~free);
        # the vector path is a single finalizer round on (idx ^ seed).
        seed_m = _mix32(seed_ref[0].astype(jnp.uint32))
        bits = _mix32(idx ^ seed_m)

        # keep with prob (1 - p); scale kept values by 1 / (1 - p).
        threshold = jnp.uint32(min(int(round(p * 2.0 ** 32)), 2 ** 32 - 1))
        keep = bits >= threshold
        scale = jnp.asarray(1.0 / (1.0 - p), dtype=y.dtype)
        y = jnp.where(keep, y * scale, jnp.zeros_like(y))

    o_ref[...] = y


def make_sinusoid_encoding(max_len, d_model, dtype=jnp.float32):
    """Deterministic sinusoid table, matching the PyTorch __init__ exactly."""
    pos = jnp.arange(max_len, dtype=jnp.float32)[:, None]             # (L, 1)
    _2i = jnp.arange(0, d_model, 2, dtype=jnp.float32)                # (ceil(D/2),)
    angle = pos / (10000.0 ** (_2i / float(d_model)))                 # (L, ceil(D/2))
    enc = jnp.zeros((max_len, d_model), dtype=jnp.float32)
    enc = enc.at[:, 0::2].set(jnp.sin(angle))
    enc = enc.at[:, 1::2].set(jnp.cos(angle[:, : d_model // 2]))
    return enc.astype(dtype)


def positional_encoding_forward(x, encoding, seed, p=0.1):
    """x: (B, S, D); encoding: (max_len, D). Returns dropout(x + pe[:S])."""
    B, S, D = x.shape
    max_len = encoding.shape[0]
    if S > max_len:
        raise ValueError(f"seq_len {S} exceeds max_len {max_len}")
    if not (0.0 <= float(p) <= 1.0):
        raise ValueError(f"dropout p must be in [0, 1], got {p}")

    # nn.Dropout(p=1.0) zeroes everything: skip the kernel (no read pass).
    if float(p) >= 1.0:
        return jnp.zeros_like(x)

    # Slice + pre-cast the PE buffer once (half the PE DMA bytes for bf16).
    pe = encoding[:S, :].astype(x.dtype)                               # (S, D)

    itemsize = jnp.dtype(x.dtype).itemsize
    row_bytes = D * itemsize
    batch_bytes = S * row_bytes

    if batch_bytes >= _TARGET_BLOCK_BYTES:
        # One batch entry per block; tile the sequence axis in multiples of 8
        # sublanes (full vreg occupancy; contiguous HBM slab per DMA).
        bt = 1
        ts = max(8, (_TARGET_BLOCK_BYTES // max(1, row_bytes)) // 8 * 8)
        ts = int(min(ts, S))
    else:
        # Whole sequence fits in one block; pack batch entries to keep each
        # DMA ~4 MiB.  ts == full S extent (allowed even if S % 8 != 0).
        ts = S
        bt = int(min(B, max(1, _TARGET_BLOCK_BYTES // max(1, batch_bytes))))

    num_s = pl.cdiv(S, ts)
    num_b = pl.cdiv(B, bt)

    x_block_bytes = bt * ts * D * itemsize
    pe_block_bytes = ts * D * itemsize
    # Double-buffered x + out + pe, plus headroom; capped below v7x's 64 MiB
    # physical VMEM, floored above v5e's 16 MiB scoped default.
    vmem_need = 2 * (2 * x_block_bytes + pe_block_bytes)
    vmem_limit = int(min(56 << 20, max(32 << 20, vmem_need + (8 << 20))))

    kernel = functools.partial(_pe_dropout_kernel, p=float(p),
                               bt=bt, ts=ts, S=S, D=D)

    out = pl.pallas_call(
        kernel,
        out_shape=jax.ShapeDtypeStruct((B, S, D), x.dtype),
        grid_spec=pltpu.PrefetchScalarGridSpec(
            num_scalar_prefetch=1,               # seed lives in SMEM
            # b innermost => the PE block index is constant across the inner
            # axis and Pallas skips re-DMA of the PE tile.
            grid=(num_s, num_b),
            in_specs=[
                pl.BlockSpec((bt, ts, D), lambda s, b, seed_ref: (b, s, 0)),  # x
                pl.BlockSpec((ts, D), lambda s, b, seed_ref: (s, 0)),         # pe
            ],
            out_specs=pl.BlockSpec((bt, ts, D),
                                   lambda s, b, seed_ref: (b, s, 0)),
        ),
        compiler_params=pltpu.CompilerParams(
            dimension_semantics=("parallel", "parallel"),
            vmem_limit_bytes=vmem_limit),
    )(jnp.full((1,), seed, dtype=jnp.int32), x, pe)

    return out


if __name__ == "__main__":
    # Small shapes consistent with forward(x) where x is (batch, seq_len, d_model).
    batch, seq_len, d_model, max_len = 2, 8, 32, 64
    dropout_p = 0.1

    key = jax.random.PRNGKey(0)
    x = jax.random.normal(key, (batch, seq_len, d_model), dtype=jnp.float32)

    encoding = make_sinusoid_encoding(max_len, d_model)   # deterministic buffer
    ref = x + encoding[:seq_len, :][None, :, :]

    # 1) Deterministic path (p = 0): must match the pure-JAX reference.
    out0 = positional_encoding_forward(x, encoding, seed=0, p=0.0)
    out0 = jax.block_until_ready(out0)
    assert out0.shape == x.shape and out0.dtype == x.dtype
    assert float(jnp.max(jnp.abs(out0 - ref))) < 1e-5

    # 2) Dropout path: every element is either 0 (dropped) or ref/(1-p) (kept).
    out = positional_encoding_forward(x, encoding, seed=123, p=dropout_p)
    out = jax.block_until_ready(out)
    assert out.shape == x.shape and out.dtype == x.dtype
    scale = 1.0 / (1.0 - dropout_p)
    per_elem_err = jnp.minimum(jnp.abs(out), jnp.abs(out - ref * scale))
    assert float(jnp.max(per_elem_err)) < 1e-4
    n_dropped = int(jnp.sum(out == 0.0))
    n_total = out.size
    assert 0 < n_dropped < n_total          # some kept, some dropped
    assert n_dropped / n_total < 0.5        # roughly consistent with p = 0.1

    # 3) p = 1.0 short-circuit: everything zeroed, no kernel launch.
    out1 = jax.block_until_ready(
        positional_encoding_forward(x, encoding, seed=7, p=1.0))
    assert float(jnp.max(jnp.abs(out1))) == 0.0

    print("KERNEL_OK")
</pallas_src>

<mosaic_0001>
module attributes {stable_mosaic.version = 11 : i64} {
  func.func @_pe_dropout_kernel(%arg0: i32, %arg1: i32, %arg2: memref<1xi32, #tpu.memory_space<smem>>, %arg3: memref<2x8x32xf32, #tpu.memory_space<vmem>>, %arg4: memref<8x32xf32, #tpu.memory_space<vmem>>, %arg5: memref<2x8x32xf32, #tpu.memory_space<vmem>>) attributes {dimension_semantics = [#tpu.dimension_semantics<parallel>, #tpu.dimension_semantics<parallel>], iteration_bounds = array<i64: 1, 1>, scalar_prefetch = 1 : i64, scratch_operands = 0 : i64, tpu.core_type = #tpu.core_type<tc>, window_params = [{transform_indices = @transform_0, window_bounds = array<i64: 2, 8, 32>}, {transform_indices = @transform_1, window_bounds = array<i64: 8, 32>}, {transform_indices = @transform_2, window_bounds = array<i64: 2, 8, 32>}]} {
    %c0 = arith.constant 0 : index
    %c0_0 = arith.constant 0 : index
    %c0_1 = arith.constant 0 : index
    %0 = vector.load %arg3[%c0, %c0_0, %c0_1] : memref<2x8x32xf32, #tpu.memory_space<vmem>>, vector<2x8x32xf32>
    %c0_2 = arith.constant 0 : index
    %c0_3 = arith.constant 0 : index
    %1 = vector.load %arg4[%c0_2, %c0_3] : memref<8x32xf32, #tpu.memory_space<vmem>>, vector<8x32xf32>
    %2 = vector.shape_cast %1 : vector<8x32xf32> to vector<1x8x32xf32>
    %3 = vector.broadcast %2 : vector<1x8x32xf32> to vector<2x8x32xf32>
    %4 = arith.addf %0, %3 : vector<2x8x32xf32>
    %c0_4 = arith.constant 0 : index
    %c0_5 = arith.constant 0 : index
    %c0_6 = arith.constant 0 : index
    %5 = vector.load %arg5[%c0_4, %c0_5, %c0_6] : memref<2x8x32xf32, #tpu.memory_space<vmem>>, vector<2x8x32xf32>
    tpu.vector_store %arg5[%c0_4, %c0_5, %c0_6], %4 {strides = array<i32>} : memref<2x8x32xf32, #tpu.memory_space<vmem>>, vector<2x8x32xf32>,
    return
  }
  func.func @transform_0(%arg0: i32, %arg1: i32, %arg2: memref<1xi32, #tpu.memory_space<smem>>) -> (i32, i32, i32) {
    %c0_i32 = arith.constant 0 : i32
    %c0_i32_0 = arith.constant 0 : i32
    return %arg1, %arg0, %c0_i32 : i32, i32, i32
  }
  func.func @transform_1(%arg0: i32, %arg1: i32, %arg2: memref<1xi32, #tpu.memory_space<smem>>) -> (i32, i32) {
    %c0_i32 = arith.constant 0 : i32
    %c0_i32_0 = arith.constant 0 : i32
    return %arg0, %c0_i32 : i32, i32
  }
  func.func @transform_2(%arg0: i32, %arg1: i32, %arg2: memref<1xi32, #tpu.memory_space<smem>>) -> (i32, i32, i32) {
    %c0_i32 = arith.constant 0 : i32
    %c0_i32_0 = arith.constant 0 : i32
    return %arg1, %arg0, %c0_i32 : i32, i32, i32
  }
}

</mosaic_0001>

<llo_original>
// kernel: tpu_custom_call.1
$region0: #{tpu_custom_call.1}
  #allocation0 [shape = 'u32[]', space=smem, size = 0x4, offset = 0x4, fixed_abs, tag = 'smem constant byte address 0x4 - core index']
  #allocation1 [shape = 'u32[72,128]{1,0:T(1,128)}', space=vmem, size = 0x9000, scoped, tag = 'internal scratch']
  #allocation2 [shape = 's32[1]{0}', space=sflag, size = 0x4, scoped, tag = 'scoped memory for tpu_custom_call.1']
  #allocation3 [shape = 's32[1]{0:T(128)S(6)}', space=smem, size = 0x200, scoped, tag = 'prefetched SMEM operand 0']
  %s0 = inlined_call_operand.<no memory space> [shape: s32[1], index: 0, kind: input, shape index: {}]
  %s1 = inlined_call_operand.hbm [shape: f32[2,8,32], index: 1, kind: input, shape index: {}]
  %s2 = inlined_call_operand.hbm [shape: f32[8,32], index: 2, kind: input, shape index: {}]
  %s3 = inlined_call_operand.hbm [shape: f32[2,8,32], index: 3, kind: output, shape index: {}]
  %s4 = sld [smem:[#allocation0]]
  $region26: #{tpu_custom_call.1} parent=0
    _
  %s6 = ssub.s32 1, %s4
  %s7 = scalar_select 0, %s6, %s4
  %8 = sst [smem:[#allocation3]] %s0
  $region1: #{tpu_custom_call.1} parent=0
    #allocation4 [shape = 'u8[8192]{0}', space=vmem, size = 0x2000, scoped, tag = 'input window, operand 1, single buffered']
    #allocation5 [shape = 's32[1]{0}', space=sflag, size = 0x4, scoped, tag = 'scoped memory for tpu_custom_call.1']
    #allocation6 [shape = 's32[1]{0}', space=sflag, size = 0x4, scoped, tag = 'scoped memory for tpu_custom_call.1']
    #allocation7 [shape = 'u8[4096]{0}', space=vmem, size = 0x1000, scoped, tag = 'input window, operand 2, single buffered']
    #allocation8 [shape = 's32[1]{0}', space=sflag, size = 0x4, scoped, tag = 'scoped memory for tpu_custom_call.1']
    #allocation9 [shape = 'u8[8192]{0}', space=vmem, size = 0x2000, scoped, tag = 'output window, operand 0, single buffered']
    %9 = vsyncpa [#allocation5], 0
    %10 = vsyncpa [#allocation8], 0
    %11 = vsyncpa [#allocation6], 0
    // Predicated region
    $region2: #{tpu_custom_call.1} parent=1 // pred_check
      _
    $region3: #{tpu_custom_call.1} parent=1 // pred_check_branch
      %13 = sbr.rel (0) target = $region5
    $region4: #{tpu_custom_call.1} parent=1 // pred_region
      %15 = vsyncadd [#allocation5], 0
      %s16 = sshll.u32 %s1, 4
      %s17 = int_to_ptr.hbm [resolvable:$true] %s16
      %s18 = sshll.u32 [#allocation4], 4
      %s19 = int_to_ptr.vmem [resolvable:$true] %s18
      %24 = dma.hbm_to_vmem [thread:$0]  %s17, 256, %s19, [#allocation5], 128, 128, 8
    $region5: #{tpu_custom_call.1} parent=1 // pred_fallthru
      _
    // Predicated region
    $region6: #{tpu_custom_call.1} parent=1 // pred_check
      _
    $region7: #{tpu_custom_call.1} parent=1 // pred_check_branch
      %26 = sbr.rel (0) target = $region9
    $region8: #{tpu_custom_call.1} parent=1 // pred_region
      %28 = vsyncadd [#allocation8], 0
      %s30 = sshll.u32 %s2, 4
      %s31 = int_to_ptr.hbm [resolvable:$true] %s30
      %s32 = sshll.u32 [#allocation7], 4
      %s33 = int_to_ptr.vmem [resolvable:$true] %s32
      %35 = dma.hbm_to_vmem [thread:$0]  %s31, 128, %s33, [#allocation8]
    $region9: #{tpu_custom_call.1} parent=1 // pred_fallthru
      _
    // Predicated region
    $region10: #{tpu_custom_call.1} parent=1 // pred_check
      _
    $region11: #{tpu_custom_call.1} parent=1 // pred_check_branch
      %37 = sbr.rel (0) target = $region13
    $region12: #{tpu_custom_call.1} parent=1 // pred_region
      %39 = dma.done [#allocation5], 256
    $region13: #{tpu_custom_call.1} parent=1 // pred_fallthru
      _
    // Predicated region
    $region14: #{tpu_custom_call.1} parent=1 // pred_check
      _
    $region15: #{tpu_custom_call.1} parent=1 // pred_check_branch
      %41 = sbr.rel (0) target = $region17
    $region16: #{tpu_custom_call.1} parent=1 // pred_region
      %43 = dma.done [#allocation8], 128
    $region17: #{tpu_custom_call.1} parent=1 // pred_fallthru
      _
    %v44 = vld [vmem:[#allocation4] sm:$0xff]
    %v45 = vld [vmem:[#allocation4 + $0x8] sm:$0xff]
    %v46 = vld [vmem:[#allocation7] sm:$0xff]
    %v47 = vadd.f32 %v44, %v46
    %v48 = vadd.f32 %v45, %v46
    %vm49 = vcmask 261120
    %50 = vst.msk [vmem:[#allocation9] sm:$0xff] %vm49, %v47
    %51 = vst.msk [vmem:[#allocation9 + $0x8] sm:$0xff] %vm49, %v48
    // Predicated region
    $region18: #{tpu_custom_call.1} parent=1 // pred_check
      _
    $region19: #{tpu_custom_call.1} parent=1 // pred_check_branch
      %53 = sbr.rel (0) target = $region21
    $region20: #{tpu_custom_call.1} parent=1 // pred_region
      %55 = vsyncadd [#allocation6], 0
      %s56 = sshll.u32 [#allocation9], 4
      %s57 = int_to_ptr.vmem [resolvable:$true] %s56
      %s58 = sshll.u32 %s3, 4
      %s59 = int_to_ptr.hbm [resolvable:$true] %s58
      %64 = dma.vmem_to_hbm [thread:$0]  %s57, 256, %s59, [#allocation6], 128, 128, 8
    $region21: #{tpu_custom_call.1} parent=1 // pred_fallthru
      _
    // Predicated region
    $region22: #{tpu_custom_call.1} parent=1 // pred_check
      _
    $region23: #{tpu_custom_call.1} parent=1 // pred_check_branch
      %66 = sbr.rel (0) target = $region25
    $region24: #{tpu_custom_call.1} parent=1 // pred_region
      %68 = dma.done [#allocation6], 256
    $region25: #{tpu_custom_call.1} parent=1 // pred_fallthru
      _
    %69 = vsyncpa [#allocation5], 1
    %70 = vsyncpa [#allocation8], 1
    %71 = vsyncpa [#allocation6], 1

</llo_original>
